<compile_context>
chip_gen: v7x
topology: tpu7x:2x2x1
jax: 0.10.0
libtpu: 0.0.40
codegen_flags: <defaults>
</compile_context>

<pallas_src>
import jax
import jax.numpy as jnp
from jax.experimental import pallas as pl
from jax.experimental.pallas import tpu as pltpu

_LANE = 128
_SUB = 8                       # f32 sublane tile
_TILE_BYTES = 2 << 20          # 2 MiB blocks: fits every generation's scoped VMEM
_SMALL_VMEM_BUDGET = 8 << 20   # whole-problem (in+out) budget for the fused path


# ---------------- math ----------------

def _hswish(t):
    # hardswish(t) = t * relu6(t + 3) / 6
    return t * jnp.clip(t + 3.0, 0.0, 6.0) * (1.0 / 6.0)


# ---------------- kernels ----------------

def _fused_kernel(x_ref, y_ref, z_ref, w_ref, xo_ref, yo_ref, zo_ref, wo_ref):
    # x, y, z: hardswish(in*2 - 1); w: hardswish(hardswish(in*2 - 1))
    for src, dst, twice in ((x_ref, xo_ref, False),
                            (y_ref, yo_ref, False),
                            (z_ref, zo_ref, False),
                            (w_ref, wo_ref, True)):
        t = src[...].astype(jnp.float32) * 2.0 - 1.0
        h = _hswish(t)
        if twice:
            h = _hswish(h)
        dst[...] = h.astype(dst.dtype)


def _hswish1_kernel(x_ref, o_ref):
    t = x_ref[...].astype(jnp.float32) * 2.0 - 1.0
    o_ref[...] = _hswish(t).astype(o_ref.dtype)


def _hswish2_kernel(w_ref, o_ref):
    t = w_ref[...].astype(jnp.float32) * 2.0 - 1.0
    o_ref[...] = _hswish(_hswish(t)).astype(o_ref.dtype)


# ---------------- wrappers ----------------

def _as_2d(a):
    # Leading-dim collapse only (bitcast-level reshape, no HBM copy).
    if a.ndim == 2:
        return a
    if a.ndim < 2:
        return a.reshape(1, -1)
    return a.reshape(-1, a.shape[-1])


def _fused_whole(x, y, z, w):
    """One launch, 4 inputs / 4 outputs, whole-array blocks resident in VMEM."""
    ins2d = [_as_2d(a) for a in (x, y, z, w)]
    out_shapes = tuple(jax.ShapeDtypeStruct(a.shape, a.dtype) for a in ins2d)
    outs = pl.pallas_call(_fused_kernel, out_shape=out_shapes)(*ins2d)
    return tuple(o.reshape(a.shape) for o, a in zip(outs, (x, y, z, w)))


def _tiled_elementwise(kernel, arr):
    """Streaming path for large arrays: lane-dense (rows, 128) blocks."""
    n = int(arr.size)
    itemsize = jnp.dtype(arr.dtype).itemsize
    if n % (_SUB * _LANE) != 0:
        # Rare ragged case: whole-array block (full dims bypass (8,128) rule).
        a2 = _as_2d(arr)
        out = pl.pallas_call(
            kernel, out_shape=jax.ShapeDtypeStruct(a2.shape, a2.dtype))(a2)
        return out.reshape(arr.shape)

    rows = n // _LANE
    a2 = arr.reshape(rows, _LANE)            # contiguous flatten -> bitcast
    cap = max(_SUB, (_TILE_BYTES // (itemsize * _LANE)) // _SUB * _SUB)
    tile_rows = min(cap, rows)
    if tile_rows >= rows and rows > _SUB:
        # Force >= 2 blocks so v7x's second TensorCore gets work.
        tile_rows = max(_SUB, (rows // 2) // _SUB * _SUB)
    grid = (pl.cdiv(rows, tile_rows),)

    out = pl.pallas_call(
        kernel,
        out_shape=jax.ShapeDtypeStruct(a2.shape, a2.dtype),
        grid=grid,
        in_specs=[pl.BlockSpec((tile_rows, _LANE), lambda i: (i, 0))],
        out_specs=pl.BlockSpec((tile_rows, _LANE), lambda i: (i, 0)),
        compiler_params=pltpu.CompilerParams(
            dimension_semantics=("parallel",)),
    )(a2)
    return out.reshape(arr.shape)


@jax.jit
def model_forward(x, y, z, w):
    total_bytes = 2 * sum(int(a.size) * jnp.dtype(a.dtype).itemsize
                          for a in (x, y, z, w))
    if total_bytes <= _SMALL_VMEM_BUDGET:
        return _fused_whole(x, y, z, w)
    # Large inputs: stream each tensor through HBM<->VMEM blocks.
    return (_tiled_elementwise(_hswish1_kernel, x),
            _tiled_elementwise(_hswish1_kernel, y),
            _tiled_elementwise(_hswish1_kernel, z),
            _tiled_elementwise(_hswish2_kernel, w))


# ---------------- pure-JAX reference (mirrors the PyTorch module) ----------------

def _reference(x, y, z, w):
    x = x * 2 - 1
    y = y * 2 - 1
    z = z * 2 - 1
    w = w * 2 - 1
    x = x * jnp.clip(x + 3.0, 0.0, 6.0) / 6.0           # F.hardswish
    y = y * (jnp.clip(y + 3.0, 0.0, 6.0) / 6.0)         # y * hardsigmoid(y)
    z = z * jnp.clip(z + 3.0, 0.0, 6.0) / 6.0           # z * hardtanh(z+3,0,6)/6
    w = (jnp.clip(w + 3.0, 0.0, 6.0) / 6.0) * w         # hardswish_forward_2
    w = w * jnp.clip(w + 3.0, 0.0, 6.0) / 6.0           # hardswish_forward_3
    return x, y, z, w


if __name__ == "__main__":
    key = jax.random.PRNGKey(0)
    k1, k2, k3, k4 = jax.random.split(key, 4)

    x = jax.random.uniform(k1, (2, 16), dtype=jnp.float32)
    y = jax.random.uniform(k2, (2, 4, 16), dtype=jnp.float32)
    z = jax.random.uniform(k3, (2, 3, 8, 16), dtype=jnp.float32)
    w = jax.random.uniform(k4, (2, 3, 4, 8, 16), dtype=jnp.float32)

    outs = jax.block_until_ready(model_forward(x, y, z, w))
    refs = _reference(x, y, z, w)
    for o, r in zip(outs, refs):
        assert o.shape == r.shape and o.dtype == r.dtype
        assert jnp.allclose(o, r, atol=1e-6, rtol=1e-6), "mismatch vs reference"

    print("KERNEL_OK")
</pallas_src>

<mosaic_0001>
module attributes {stable_mosaic.version = 11 : i64} {
  func.func @_fused_kernel(%arg0: memref<2x16xf32, #tpu.memory_space<vmem>>, %arg1: memref<8x16xf32, #tpu.memory_space<vmem>>, %arg2: memref<48x16xf32, #tpu.memory_space<vmem>>, %arg3: memref<192x16xf32, #tpu.memory_space<vmem>>, %arg4: memref<2x16xf32, #tpu.memory_space<vmem>>, %arg5: memref<8x16xf32, #tpu.memory_space<vmem>>, %arg6: memref<48x16xf32, #tpu.memory_space<vmem>>, %arg7: memref<192x16xf32, #tpu.memory_space<vmem>>) attributes {dimension_semantics = [], scalar_prefetch = 0 : i64, scratch_operands = 0 : i64, tpu.core_type = #tpu.core_type<tc>} {
    %c0 = arith.constant 0 : index
    %c0_0 = arith.constant 0 : index
    %0 = vector.load %arg0[%c0, %c0_0] : memref<2x16xf32, #tpu.memory_space<vmem>>, vector<2x16xf32>
    %cst = arith.constant 2.000000e+00 : f32
    %1 = vector.broadcast %cst : f32 to vector<2x16xf32>
    %2 = arith.mulf %0, %1 : vector<2x16xf32>
    %cst_1 = arith.constant 1.000000e+00 : f32
    %3 = vector.broadcast %cst_1 : f32 to vector<2x16xf32>
    %4 = arith.subf %2, %3 : vector<2x16xf32>
    %cst_2 = arith.constant 3.000000e+00 : f32
    %5 = vector.broadcast %cst_2 : f32 to vector<2x16xf32>
    %6 = arith.addf %4, %5 : vector<2x16xf32>
    %cst_3 = arith.constant 0.000000e+00 : f32
    %cst_4 = arith.constant 6.000000e+00 : f32
    %7 = vector.broadcast %cst_3 : f32 to vector<2x16xf32>
    %8 = arith.maximumf %7, %6 : vector<2x16xf32>
    %9 = vector.broadcast %cst_4 : f32 to vector<2x16xf32>
    %10 = arith.minimumf %9, %8 : vector<2x16xf32>
    %11 = arith.mulf %4, %10 : vector<2x16xf32>
    %cst_5 = arith.constant 0.166666672 : f32
    %12 = vector.broadcast %cst_5 : f32 to vector<2x16xf32>
    %13 = arith.mulf %11, %12 : vector<2x16xf32>
    %c0_6 = arith.constant 0 : index
    %c0_7 = arith.constant 0 : index
    %14 = vector.load %arg4[%c0_6, %c0_7] : memref<2x16xf32, #tpu.memory_space<vmem>>, vector<2x16xf32>
    tpu.vector_store %arg4[%c0_6, %c0_7], %13 {strides = array<i32>} : memref<2x16xf32, #tpu.memory_space<vmem>>, vector<2x16xf32>,
    %c0_8 = arith.constant 0 : index
    %c0_9 = arith.constant 0 : index
    %15 = vector.load %arg1[%c0_8, %c0_9] : memref<8x16xf32, #tpu.memory_space<vmem>>, vector<8x16xf32>
    %cst_10 = arith.constant 2.000000e+00 : f32
    %16 = vector.broadcast %cst_10 : f32 to vector<8x16xf32>
    %17 = arith.mulf %15, %16 : vector<8x16xf32>
    %cst_11 = arith.constant 1.000000e+00 : f32
    %18 = vector.broadcast %cst_11 : f32 to vector<8x16xf32>
    %19 = arith.subf %17, %18 : vector<8x16xf32>
    %cst_12 = arith.constant 3.000000e+00 : f32
    %20 = vector.broadcast %cst_12 : f32 to vector<8x16xf32>
    %21 = arith.addf %19, %20 : vector<8x16xf32>
    %cst_13 = arith.constant 0.000000e+00 : f32
    %cst_14 = arith.constant 6.000000e+00 : f32
    %22 = vector.broadcast %cst_13 : f32 to vector<8x16xf32>
    %23 = arith.maximumf %22, %21 : vector<8x16xf32>
    %24 = vector.broadcast %cst_14 : f32 to vector<8x16xf32>
    %25 = arith.minimumf %24, %23 : vector<8x16xf32>
    %26 = arith.mulf %19, %25 : vector<8x16xf32>
    %cst_15 = arith.constant 0.166666672 : f32
    %27 = vector.broadcast %cst_15 : f32 to vector<8x16xf32>
    %28 = arith.mulf %26, %27 : vector<8x16xf32>
    %c0_16 = arith.constant 0 : index
    %c0_17 = arith.constant 0 : index
    %29 = vector.load %arg5[%c0_16, %c0_17] : memref<8x16xf32, #tpu.memory_space<vmem>>, vector<8x16xf32>
    tpu.vector_store %arg5[%c0_16, %c0_17], %28 {strides = array<i32>} : memref<8x16xf32, #tpu.memory_space<vmem>>, vector<8x16xf32>,
    %c0_18 = arith.constant 0 : index
    %c0_19 = arith.constant 0 : index
    %30 = vector.load %arg2[%c0_18, %c0_19] : memref<48x16xf32, #tpu.memory_space<vmem>>, vector<48x16xf32>
    %cst_20 = arith.constant 2.000000e+00 : f32
    %31 = vector.broadcast %cst_20 : f32 to vector<48x16xf32>
    %32 = arith.mulf %30, %31 : vector<48x16xf32>
    %cst_21 = arith.constant 1.000000e+00 : f32
    %33 = vector.broadcast %cst_21 : f32 to vector<48x16xf32>
    %34 = arith.subf %32, %33 : vector<48x16xf32>
    %cst_22 = arith.constant 3.000000e+00 : f32
    %35 = vector.broadcast %cst_22 : f32 to vector<48x16xf32>
    %36 = arith.addf %34, %35 : vector<48x16xf32>
    %cst_23 = arith.constant 0.000000e+00 : f32
    %cst_24 = arith.constant 6.000000e+00 : f32
    %37 = vector.broadcast %cst_23 : f32 to vector<48x16xf32>
    %38 = arith.maximumf %37, %36 : vector<48x16xf32>
    %39 = vector.broadcast %cst_24 : f32 to vector<48x16xf32>
    %40 = arith.minimumf %39, %38 : vector<48x16xf32>
    %41 = arith.mulf %34, %40 : vector<48x16xf32>
    %cst_25 = arith.constant 0.166666672 : f32
    %42 = vector.broadcast %cst_25 : f32 to vector<48x16xf32>
    %43 = arith.mulf %41, %42 : vector<48x16xf32>
    %c0_26 = arith.constant 0 : index
    %c0_27 = arith.constant 0 : index
    %44 = vector.load %arg6[%c0_26, %c0_27] : memref<48x16xf32, #tpu.memory_space<vmem>>, vector<48x16xf32>
    tpu.vector_store %arg6[%c0_26, %c0_27], %43 {strides = array<i32>} : memref<48x16xf32, #tpu.memory_space<vmem>>, vector<48x16xf32>,
    %c0_28 = arith.constant 0 : index
    %c0_29 = arith.constant 0 : index
    %45 = vector.load %arg3[%c0_28, %c0_29] : memref<192x16xf32, #tpu.memory_space<vmem>>, vector<192x16xf32>
    %cst_30 = arith.constant 2.000000e+00 : f32
    %46 = vector.broadcast %cst_30 : f32 to vector<192x16xf32>
    %47 = arith.mulf %45, %46 : vector<192x16xf32>
    %cst_31 = arith.constant 1.000000e+00 : f32
    %48 = vector.broadcast %cst_31 : f32 to vector<192x16xf32>
    %49 = arith.subf %47, %48 : vector<192x16xf32>
    %cst_32 = arith.constant 3.000000e+00 : f32
    %50 = vector.broadcast %cst_32 : f32 to vector<192x16xf32>
    %51 = arith.addf %49, %50 : vector<192x16xf32>
    %cst_33 = arith.constant 0.000000e+00 : f32
    %cst_34 = arith.constant 6.000000e+00 : f32
    %52 = vector.broadcast %cst_33 : f32 to vector<192x16xf32>
    %53 = arith.maximumf %52, %51 : vector<192x16xf32>
    %54 = vector.broadcast %cst_34 : f32 to vector<192x16xf32>
    %55 = arith.minimumf %54, %53 : vector<192x16xf32>
    %56 = arith.mulf %49, %55 : vector<192x16xf32>
    %cst_35 = arith.constant 0.166666672 : f32
    %57 = vector.broadcast %cst_35 : f32 to vector<192x16xf32>
    %58 = arith.mulf %56, %57 : vector<192x16xf32>
    %cst_36 = arith.constant 3.000000e+00 : f32
    %59 = vector.broadcast %cst_36 : f32 to vector<192x16xf32>
    %60 = arith.addf %58, %59 : vector<192x16xf32>
    %cst_37 = arith.constant 0.000000e+00 : f32
    %cst_38 = arith.constant 6.000000e+00 : f32
    %61 = vector.broadcast %cst_37 : f32 to vector<192x16xf32>
    %62 = arith.maximumf %61, %60 : vector<192x16xf32>
    %63 = vector.broadcast %cst_38 : f32 to vector<192x16xf32>
    %64 = arith.minimumf %63, %62 : vector<192x16xf32>
    %65 = arith.mulf %58, %64 : vector<192x16xf32>
    %cst_39 = arith.constant 0.166666672 : f32
    %66 = vector.broadcast %cst_39 : f32 to vector<192x16xf32>
    %67 = arith.mulf %65, %66 : vector<192x16xf32>
    %c0_40 = arith.constant 0 : index
    %c0_41 = arith.constant 0 : index
    %68 = vector.load %arg7[%c0_40, %c0_41] : memref<192x16xf32, #tpu.memory_space<vmem>>, vector<192x16xf32>
    tpu.vector_store %arg7[%c0_40, %c0_41], %67 {strides = array<i32>} : memref<192x16xf32, #tpu.memory_space<vmem>>, vector<192x16xf32>,
    return
  }
}

</mosaic_0001>

<llo_original>
// kernel: model_forward.1
$region0: #{model_forward.1}
  #allocation0 [shape = 'u32[]', space=smem, size = 0x4, offset = 0x4, fixed_abs, tag = 'smem constant byte address 0x4 - core index']
  #allocation1 [shape = 'u32[144,128]{1,0:T(1,128)}', space=vmem, size = 0x12000, scoped, tag = 'internal scratch']
  %s0 = inlined_call_operand.vmem [shape: f32[2,16], index: 0, kind: input, shape index: {}]
  %s1 = inlined_call_operand.vmem [shape: f32[8,16], index: 1, kind: input, shape index: {}]
  %s2 = inlined_call_operand.hbm [shape: f32[48,16], index: 2, kind: input, shape index: {}]
  %s3 = inlined_call_operand.hbm [shape: f32[192,16], index: 3, kind: input, shape index: {}]
  %s4 = inlined_call_operand.hbm [shape: f32[2,16], index: 4, kind: output, shape index: {0}]
  %s5 = inlined_call_operand.hbm [shape: f32[8,16], index: 5, kind: output, shape index: {1}]
  %s6 = inlined_call_operand.hbm [shape: f32[48,16], index: 6, kind: output, shape index: {2}]
  %s7 = inlined_call_operand.hbm [shape: f32[192,16], index: 7, kind: output, shape index: {3}]
  %8 = xla_tuple %s4, %s5, %s6, %s7
  %s9 = sld [smem:[#allocation0]]
  $region58: #{model_forward.1} parent=0
    _
  %s11 = ssub.s32 1, %s9
  %s12 = scalar_select 0, %s11, %s9
  $region1: #{model_forward.1} parent=0
    #allocation2 [shape = 'u8[24576]{0}', space=vmem, size = 0x6000, scoped, tag = 'input window, operand 2, single buffered']
    #allocation3 [shape = 's32[1]{0}', space=sflag, size = 0x4, scoped, tag = 'scoped memory for model_forward.1']
    #allocation4 [shape = 's32[1]{0}', space=sflag, size = 0x4, scoped, tag = 'scoped memory for model_forward.1']
    #allocation5 [shape = 'u8[98304]{0}', space=vmem, size = 0x18000, scoped, tag = 'input window, operand 3, single buffered']
    #allocation6 [shape = 's32[1]{0}', space=sflag, size = 0x4, scoped, tag = 'scoped memory for model_forward.1']
    #allocation7 [shape = 'u8[1024]{0}', space=vmem, size = 0x400, scoped, tag = 'output window, operand 0, single buffered']
    #allocation8 [shape = 'u8[4096]{0}', space=vmem, size = 0x1000, scoped, tag = 'output window, operand 1, single buffered']
    #allocation9 [shape = 's32[1]{0}', space=sflag, size = 0x4, scoped, tag = 'scoped memory for model_forward.1']
    #allocation10 [shape = 'u8[24576]{0}', space=vmem, size = 0x6000, scoped, tag = 'output window, operand 2, single buffered']
    #allocation11 [shape = 'u8[98304]{0}', space=vmem, size = 0x18000, scoped, tag = 'output window, operand 3, single buffered']
    #allocation12 [shape = 's32[1]{0}', space=sflag, size = 0x4, scoped, tag = 'scoped memory for model_forward.1']
    %13 = vsyncpa [#allocation3], 0
    %14 = vsyncpa [#allocation6], 0
    %15 = vsyncpa [#allocation4], 0
    %16 = vsyncpa [#allocation9], 0
    %17 = vsyncpa [#allocation12], 0
    // Predicated region
    $region2: #{model_forward.1} parent=1 // pred_check
      _
    $region3: #{model_forward.1} parent=1 // pred_check_branch
      %19 = sbr.rel (0) target = $region5
    $region4: #{model_forward.1} parent=1 // pred_region
      _
    $region5: #{model_forward.1} parent=1 // pred_fallthru
      _
    // Predicated region
    $region6: #{model_forward.1} parent=1 // pred_check
      _
    $region7: #{model_forward.1} parent=1 // pred_check_branch
      %21 = sbr.rel (0) target = $region9
    $region8: #{model_forward.1} parent=1 // pred_region
      _
    $region9: #{model_forward.1} parent=1 // pred_fallthru
      _
    // Predicated region
    $region10: #{model_forward.1} parent=1 // pred_check
      _
    $region11: #{model_forward.1} parent=1 // pred_check_branch
      %23 = sbr.rel (0) target = $region13
    $region12: #{model_forward.1} parent=1 // pred_region
      %s25 = ssub.s32 768, 768
      %26 = vsyncadd [#allocation3], %s25
      %s27 = sshll.u32 [#allocation2], 4
      %s28 = int_to_ptr.vmem [resolvable:$true] %s27
      %33 = dma.hbm_to_vmem [thread:$0]  %s2, 768, %s28, [#allocation3], 128, 128, 8
    $region13: #{model_forward.1} parent=1 // pred_fallthru
      _
    // Predicated region
    $region14: #{model_forward.1} parent=1 // pred_check
      _
    $region15: #{model_forward.1} parent=1 // pred_check_branch
      %35 = sbr.rel (0) target = $region17
    $region16: #{model_forward.1} parent=1 // pred_region
      %s37 = ssub.s32 3072, 3072
      %38 = vsyncadd [#allocation6], %s37
      %s39 = sshll.u32 [#allocation5], 4
      %s40 = int_to_ptr.vmem [resolvable:$true] %s39
      %45 = dma.hbm_to_vmem [thread:$0]  %s3, 3072, %s40, [#allocation6], 128, 128, 8
    $region17: #{model_forward.1} parent=1 // pred_fallthru
      _
    // Predicated region
    $region18: #{model_forward.1} parent=1 // pred_check
      _
    $region19: #{model_forward.1} parent=1 // pred_check_branch
      %47 = sbr.rel (0) target = $region21
    $region20: #{model_forward.1} parent=1 // pred_region
      %48 = dma.done [#allocation3], 768
    $region21: #{model_forward.1} parent=1 // pred_fallthru
      _
    // Predicated region
    $region22: #{model_forward.1} parent=1 // pred_check
      _
    $region23: #{model_forward.1} parent=1 // pred_check_branch
      %50 = sbr.rel (0) target = $region25
    $region24: #{model_forward.1} parent=1 // pred_region
      %51 = dma.done [#allocation6], 3072
    $region25: #{model_forward.1} parent=1 // pred_fallthru
      _
    %v52 = vld [vmem:[%s0] sm:$0x3]
    %v53 = vmul.f32 %v52, 2.0
    %v54 = vsub.f32 %v53, 1.0
    %v55 = vadd.f32 %v54, 3.0
    %v56 = vmax.f32 %v55, 0.0
    %v57 = vmin.f32 %v56, 6.0
    %v58 = vmul.f32 %v54, %v57
    %v59 = vmul.f32 %v58, 0.16666667
    %vm60 = vcmask 123904
    %61 = vst.msk [vmem:[#allocation7] sm:$0x3] %vm60, %v59
    %v62 = vld [vmem:[%s1] sm:$0xff]
    %v63 = vmul.f32 %v62, 2.0
    %v64 = vsub.f32 %v63, 1.0
    %v65 = vadd.f32 %v64, 3.0
    %v66 = vmax.f32 %v65, 0.0
    %v67 = vmin.f32 %v66, 6.0
    %v68 = vmul.f32 %v64, %v67
    %v69 = vmul.f32 %v68, 0.16666667
    %vm70 = vcmask 130048
    %71 = vst.msk [vmem:[#allocation8] sm:$0xff] %vm70, %v69
    %v72 = vld [vmem:[#allocation2] sm:$0xff]
    %v73 = vld [vmem:[#allocation2 + $0x8] sm:$0xff]
    %v74 = vld [vmem:[#allocation2 + $0x10] sm:$0xff]
    %v75 = vld [vmem:[#allocation2 + $0x18] sm:$0xff]
    %v76 = vld [vmem:[#allocation2 + $0x20] sm:$0xff]
    %v77 = vld [vmem:[#allocation2 + $0x28] sm:$0xff]
    %v78 = vmul.f32 %v72, 2.0
    %v79 = vmul.f32 %v73, 2.0
    %v80 = vmul.f32 %v74, 2.0
    %v81 = vmul.f32 %v75, 2.0
    %v82 = vmul.f32 %v76, 2.0
    %v83 = vmul.f32 %v77, 2.0
    %v84 = vsub.f32 %v78, 1.0
    %v85 = vsub.f32 %v79, 1.0
    %v86 = vsub.f32 %v80, 1.0
    %v87 = vsub.f32 %v81, 1.0
    %v88 = vsub.f32 %v82, 1.0
    %v89 = vsub.f32 %v83, 1.0
    %v90 = vadd.f32 %v84, 3.0
    %v91 = vadd.f32 %v85, 3.0
    %v92 = vadd.f32 %v86, 3.0
    %v93 = vadd.f32 %v87, 3.0
    %v94 = vadd.f32 %v88, 3.0
    %v95 = vadd.f32 %v89, 3.0
    %v96 = vmax.f32 %v90, 0.0
    %v97 = vmax.f32 %v91, 0.0
    %v98 = vmax.f32 %v92, 0.0
    %v99 = vmax.f32 %v93, 0.0
    %v100 = vmax.f32 %v94, 0.0
    %v101 = vmax.f32 %v95, 0.0
    %v102 = vmin.f32 %v96, 6.0
    %v103 = vmin.f32 %v97, 6.0
    %v104 = vmin.f32 %v98, 6.0
    %v105 = vmin.f32 %v99, 6.0
    %v106 = vmin.f32 %v100, 6.0
    %v107 = vmin.f32 %v101, 6.0
    %v108 = vmul.f32 %v84, %v102
    %v109 = vmul.f32 %v85, %v103
    %v110 = vmul.f32 %v86, %v104
    %v111 = vmul.f32 %v87, %v105
    %v112 = vmul.f32 %v88, %v106
    %v113 = vmul.f32 %v89, %v107
    %v114 = vmul.f32 %v108, 0.16666667
    %v115 = vmul.f32 %v109, 0.16666667
    %v116 = vmul.f32 %v110, 0.16666667
    %v117 = vmul.f32 %v111, 0.16666667
    %v118 = vmul.f32 %v112, 0.16666667
    %v119 = vmul.f32 %v113, 0.16666667
    %120 = vst.msk [vmem:[#allocation10] sm:$0xff] %vm70, %v114
    %121 = vst.msk [vmem:[#allocation10 + $0x8] sm:$0xff] %vm70, %v115
    %122 = vst.msk [vmem:[#allocation10 + $0x10] sm:$0xff] %vm70, %v116
    %123 = vst.msk [vmem:[#allocation10 + $0x18] sm:$0xff] %vm70, %v117
    %124 = vst.msk [vmem:[#allocation10 + $0x20] sm:$0xff] %vm70, %v118
    %125 = vst.msk [vmem:[#allocation10 + $0x28] sm:$0xff] %vm70, %v119
    %v126 = vld [vmem:[#allocation5] sm:$0xff]
    %v127 = vld [vmem:[#allocation5 + $0x8] sm:$0xff]
    %v128 = vld [vmem:[#allocation5 + $0x10] sm:$0xff]
    %v129 = vld [vmem:[#allocation5 + $0x18] sm:$0xff]
    %v130 = vld [vmem:[#allocation5 + $0x20] sm:$0xff]
    %v131 = vld [vmem:[#allocation5 + $0x28] sm:$0xff]
    %v132 = vld [vmem:[#allocation5 + $0x30] sm:$0xff]
    %v133 = vld [vmem:[#allocation5 + $0x38] sm:$0xff]
    %v134 = vld [vmem:[#allocation5 + $0x40] sm:$0xff]
    %v135 = vld [vmem:[#allocation5 + $0x48] sm:$0xff]
    %v136 = vld [vmem:[#allocation5 + $0x50] sm:$0xff]
    %v137 = vld [vmem:[#allocation5 + $0x58] sm:$0xff]
    %v138 = vld [vmem:[#allocation5 + $0x60] sm:$0xff]
    %v139 = vld [vmem:[#allocation5 + $0x68] sm:$0xff]
    %v140 = vld [vmem:[#allocation5 + $0x70] sm:$0xff]
    %v141 = vld [vmem:[#allocation5 + $0x78] sm:$0xff]
    %v142 = vld [vmem:[#allocation5 + $0x80] sm:$0xff]
    %v143 = vld [vmem:[#allocation5 + $0x88] sm:$0xff]
    %v144 = vld [vmem:[#allocation5 + $0x90] sm:$0xff]
    %v145 = vld [vmem:[#allocation5 + $0x98] sm:$0xff]
    %v146 = vld [vmem:[#allocation5 + $0xa0] sm:$0xff]
    %v147 = vld [vmem:[#allocation5 + $0xa8] sm:$0xff]
    %v148 = vld [vmem:[#allocation5 + $0xb0] sm:$0xff]
    %v149 = vld [vmem:[#allocation5 + $0xb8] sm:$0xff]
    %v150 = vmul.f32 %v126, 2.0
    %v151 = vmul.f32 %v127, 2.0
    %v152 = vmul.f32 %v128, 2.0
    %v153 = vmul.f32 %v129, 2.0
    %v154 = vmul.f32 %v130, 2.0
    %v155 = vmul.f32 %v131, 2.0
    %v156 = vmul.f32 %v132, 2.0
    %v157 = vmul.f32 %v133, 2.0
    %v158 = vmul.f32 %v134, 2.0
    %v159 = vmul.f32 %v135, 2.0
    %v160 = vmul.f32 %v136, 2.0
    %v161 = vmul.f32 %v137, 2.0
    %v162 = vmul.f32 %v138, 2.0
    %v163 = vmul.f32 %v139, 2.0
    %v164 = vmul.f32 %v140, 2.0
    %v165 = vmul.f32 %v141, 2.0
    %v166 = vmul.f32 %v142, 2.0
    %v167 = vmul.f32 %v143, 2.0
    %v168 = vmul.f32 %v144, 2.0
    %v169 = vmul.f32 %v145, 2.0
    %v170 = vmul.f32 %v146, 2.0
    %v171 = vmul.f32 %v147, 2.0
    %v172 = vmul.f32 %v148, 2.0
    %v173 = vmul.f32 %v149, 2.0
    %v174 = vsub.f32 %v150, 1.0
    %v175 = vsub.f32 %v151, 1.0
    %v176 = vsub.f32 %v152, 1.0
    %v177 = vsub.f32 %v153, 1.0
    %v178 = vsub.f32 %v154, 1.0
    %v179 = vsub.f32 %v155, 1.0
    %v180 = vsub.f32 %v156, 1.0
    %v181 = vsub.f32 %v157, 1.0
    %v182 = vsub.f32 %v158, 1.0
    %v183 = vsub.f32 %v159, 1.0
    %v184 = vsub.f32 %v160, 1.0
    %v185 = vsub.f32 %v161, 1.0
    %v186 = vsub.f32 %v162, 1.0
    %v187 = vsub.f32 %v163, 1.0
    %v188 = vsub.f32 %v164, 1.0
    %v189 = vsub.f32 %v165, 1.0
    %v190 = vsub.f32 %v166, 1.0
    %v191 = vsub.f32 %v167, 1.0
    %v192 = vsub.f32 %v168, 1.0
    %v193 = vsub.f32 %v169, 1.0
    %v194 = vsub.f32 %v170, 1.0
    %v195 = vsub.f32 %v171, 1.0
    %v196 = vsub.f32 %v172, 1.0
    %v197 = vsub.f32 %v173, 1.0
    %v198 = vadd.f32 %v174, 3.0
    %v199 = vadd.f32 %v175, 3.0
    %v200 = vadd.f32 %v176, 3.0
    %v201 = vadd.f32 %v177, 3.0
    %v202 = vadd.f32 %v178, 3.0
    %v203 = vadd.f32 %v179, 3.0
    %v204 = vadd.f32 %v180, 3.0
    %v205 = vadd.f32 %v181, 3.0
    %v206 = vadd.f32 %v182, 3.0
    %v207 = vadd.f32 %v183, 3.0
    %v208 = vadd.f32 %v184, 3.0
    %v209 = vadd.f32 %v185, 3.0
    %v210 = vadd.f32 %v186, 3.0
    %v211 = vadd.f32 %v187, 3.0
    %v212 = vadd.f32 %v188, 3.0
    %v213 = vadd.f32 %v189, 3.0
    %v214 = vadd.f32 %v190, 3.0
    %v215 = vadd.f32 %v191, 3.0
    %v216 = vadd.f32 %v192, 3.0
    %v217 = vadd.f32 %v193, 3.0
    %v218 = vadd.f32 %v194, 3.0
    %v219 = vadd.f32 %v195, 3.0
    %v220 = vadd.f32 %v196, 3.0
    %v221 = vadd.f32 %v197, 3.0
    %v222 = vmax.f32 %v198, 0.0
    %v223 = vmax.f32 %v199, 0.0
    %v224 = vmax.f32 %v200, 0.0
    %v225 = vmax.f32 %v201, 0.0
    %v226 = vmax.f32 %v202, 0.0
    %v227 = vmax.f32 %v203, 0.0
    %v228 = vmax.f32 %v204, 0.0
    %v229 = vmax.f32 %v205, 0.0
    %v230 = vmax.f32 %v206, 0.0
    %v231 = vmax.f32 %v207, 0.0
    %v232 = vmax.f32 %v208, 0.0
    %v233 = vmax.f32 %v209, 0.0
    %v234 = vmax.f32 %v210, 0.0
    %v235 = vmax.f32 %v211, 0.0
    %v236 = vmax.f32 %v212, 0.0
    %v237 = vmax.f32 %v213, 0.0
    %v238 = vmax.f32 %v214, 0.0
    %v239 = vmax.f32 %v215, 0.0
    %v240 = vmax.f32 %v216, 0.0
    %v241 = vmax.f32 %v217, 0.0
    %v242 = vmax.f32 %v218, 0.0
    %v243 = vmax.f32 %v219, 0.0
    %v244 = vmax.f32 %v220, 0.0
    %v245 = vmax.f32 %v221, 0.0
    %v246 = vmin.f32 %v222, 6.0
    %v247 = vmin.f32 %v223, 6.0
    %v248 = vmin.f32 %v224, 6.0
    %v249 = vmin.f32 %v225, 6.0
    %v250 = vmin.f32 %v226, 6.0
    %v251 = vmin.f32 %v227, 6.0
    %v252 = vmin.f32 %v228, 6.0
    %v253 = vmin.f32 %v229, 6.0
    %v254 = vmin.f32 %v230, 6.0
    %v255 = vmin.f32 %v231, 6.0
    %v256 = vmin.f32 %v232, 6.0
    %v257 = vmin.f32 %v233, 6.0
    %v258 = vmin.f32 %v234, 6.0
    %v259 = vmin.f32 %v235, 6.0
    %v260 = vmin.f32 %v236, 6.0
    %v261 = vmin.f32 %v237, 6.0
    %v262 = vmin.f32 %v238, 6.0
    %v263 = vmin.f32 %v239, 6.0
    %v264 = vmin.f32 %v240, 6.0
    %v265 = vmin.f32 %v241, 6.0
    %v266 = vmin.f32 %v242, 6.0
    %v267 = vmin.f32 %v243, 6.0
    %v268 = vmin.f32 %v244, 6.0
    %v269 = vmin.f32 %v245, 6.0
    %v270 = vmul.f32 %v174, %v246
    %v271 = vmul.f32 %v175, %v247
    %v272 = vmul.f32 %v176, %v248
    %v273 = vmul.f32 %v177, %v249
    %v274 = vmul.f32 %v178, %v250
    %v275 = vmul.f32 %v179, %v251
    %v276 = vmul.f32 %v180, %v252
    %v277 = vmul.f32 %v181, %v253
    %v278 = vmul.f32 %v182, %v254
    %v279 = vmul.f32 %v183, %v255
    %v280 = vmul.f32 %v184, %v256
    %v281 = vmul.f32 %v185, %v257
    %v282 = vmul.f32 %v186, %v258
    %v283 = vmul.f32 %v187, %v259
    %v284 = vmul.f32 %v188, %v260
    %v285 = vmul.f32 %v189, %v261
    %v286 = vmul.f32 %v190, %v262
    %v287 = vmul.f32 %v191, %v263
    %v288 = vmul.f32 %v192, %v264
    %v289 = vmul.f32 %v193, %v265
    %v290 = vmul.f32 %v194, %v266
    %v291 = vmul.f32 %v195, %v267
    %v292 = vmul.f32 %v196, %v268
    %v293 = vmul.f32 %v197, %v269
    %v294 = vmul.f32 %v270, 0.16666667
    %v295 = vmul.f32 %v271, 0.16666667
    %v296 = vmul.f32 %v272, 0.16666667
    %v297 = vmul.f32 %v273, 0.16666667
    %v298 = vmul.f32 %v274, 0.16666667
    %v299 = vmul.f32 %v275, 0.16666667
    %v300 = vmul.f32 %v276, 0.16666667
    %v301 = vmul.f32 %v277, 0.16666667
    %v302 = vmul.f32 %v278, 0.16666667
    %v303 = vmul.f32 %v279, 0.16666667
    %v304 = vmul.f32 %v280, 0.16666667
    %v305 = vmul.f32 %v281, 0.16666667
    %v306 = vmul.f32 %v282, 0.16666667
    %v307 = vmul.f32 %v283, 0.16666667
    %v308 = vmul.f32 %v284, 0.16666667
    %v309 = vmul.f32 %v285, 0.16666667
    %v310 = vmul.f32 %v286, 0.16666667
    %v311 = vmul.f32 %v287, 0.16666667
    %v312 = vmul.f32 %v288, 0.16666667
    %v313 = vmul.f32 %v289, 0.16666667
    %v314 = vmul.f32 %v290, 0.16666667
    %v315 = vmul.f32 %v291, 0.16666667
    %v316 = vmul.f32 %v292, 0.16666667
    %v317 = vmul.f32 %v293, 0.16666667
    %v318 = vadd.f32 %v294, 3.0
    %v319 = vadd.f32 %v295, 3.0
    %v320 = vadd.f32 %v296, 3.0
    %v321 = vadd.f32 %v297, 3.0
    %v322 = vadd.f32 %v298, 3.0
    %v323 = vadd.f32 %v299, 3.0
    %v324 = vadd.f32 %v300, 3.0
    %v325 = vadd.f32 %v301, 3.0
    %v326 = vadd.f32 %v302, 3.0
    %v327 = vadd.f32 %v303, 3.0
    %v328 = vadd.f32 %v304, 3.0
    %v329 = vadd.f32 %v305, 3.0
    %v330 = vadd.f32 %v306, 3.0
    %v331 = vadd.f32 %v307, 3.0
    %v332 = vadd.f32 %v308, 3.0
    %v333 = vadd.f32 %v309, 3.0
    %v334 = vadd.f32 %v310, 3.0
    %v335 = vadd.f32 %v311, 3.0
    %v336 = vadd.f32 %v312, 3.0
    %v337 = vadd.f32 %v313, 3.0
    %v338 = vadd.f32 %v314, 3.0
    %v339 = vadd.f32 %v315, 3.0
    %v340 = vadd.f32 %v316, 3.0
    %v341 = vadd.f32 %v317, 3.0
    %v342 = vmax.f32 %v318, 0.0
    %v343 = vmax.f32 %v319, 0.0
    %v344 = vmax.f32 %v320, 0.0
    %v345 = vmax.f32 %v321, 0.0
    %v346 = vmax.f32 %v322, 0.0
    %v347 = vmax.f32 %v323, 0.0
    %v348 = vmax.f32 %v324, 0.0
    %v349 = vmax.f32 %v325, 0.0
    %v350 = vmax.f32 %v326, 0.0
    %v351 = vmax.f32 %v327, 0.0
    %v352 = vmax.f32 %v328, 0.0
    %v353 = vmax.f32 %v329, 0.0
    %v354 = vmax.f32 %v330, 0.0
    %v355 = vmax.f32 %v331, 0.0
    %v356 = vmax.f32 %v332, 0.0
    %v357 = vmax.f32 %v333, 0.0
    %v358 = vmax.f32 %v334, 0.0
    %v359 = vmax.f32 %v335, 0.0
    %v360 = vmax.f32 %v336, 0.0
    %v361 = vmax.f32 %v337, 0.0
    %v362 = vmax.f32 %v338, 0.0
    %v363 = vmax.f32 %v339, 0.0
    %v364 = vmax.f32 %v340, 0.0
    %v365 = vmax.f32 %v341, 0.0
    %v366 = vmin.f32 %v342, 6.0
    %v367 = vmin.f32 %v343, 6.0
    %v368 = vmin.f32 %v344, 6.0
    %v369 = vmin.f32 %v345, 6.0
    %v370 = vmin.f32 %v346, 6.0
    %v371 = vmin.f32 %v347, 6.0
    %v372 = vmin.f32 %v348, 6.0
    %v373 = vmin.f32 %v349, 6.0
    %v374 = vmin.f32 %v350, 6.0
    %v375 = vmin.f32 %v351, 6.0
    %v376 = vmin.f32 %v352, 6.0
    %v377 = vmin.f32 %v353, 6.0
    %v378 = vmin.f32 %v354, 6.0
    %v379 = vmin.f32 %v355, 6.0
    %v380 = vmin.f32 %v356, 6.0
    %v381 = vmin.f32 %v357, 6.0
    %v382 = vmin.f32 %v358, 6.0
    %v383 = vmin.f32 %v359, 6.0
    %v384 = vmin.f32 %v360, 6.0
    %v385 = vmin.f32 %v361, 6.0
    %v386 = vmin.f32 %v362, 6.0
    %v387 = vmin.f32 %v363, 6.0
    %v388 = vmin.f32 %v364, 6.0
    %v389 = vmin.f32 %v365, 6.0
    %v390 = vmul.f32 %v294, %v366
    %v391 = vmul.f32 %v295, %v367
    %v392 = vmul.f32 %v296, %v368
    %v393 = vmul.f32 %v297, %v369
    %v394 = vmul.f32 %v298, %v370
    %v395 = vmul.f32 %v299, %v371
    %v396 = vmul.f32 %v300, %v372
    %v397 = vmul.f32 %v301, %v373
    %v398 = vmul.f32 %v302, %v374
    %v399 = vmul.f32 %v303, %v375
    %v400 = vmul.f32 %v304, %v376
    %v401 = vmul.f32 %v305, %v377
    %v402 = vmul.f32 %v306, %v378
    %v403 = vmul.f32 %v307, %v379
    %v404 = vmul.f32 %v308, %v380
    %v405 = vmul.f32 %v309, %v381
    %v406 = vmul.f32 %v310, %v382
    %v407 = vmul.f32 %v311, %v383
    %v408 = vmul.f32 %v312, %v384
    %v409 = vmul.f32 %v313, %v385
    %v410 = vmul.f32 %v314, %v386
    %v411 = vmul.f32 %v315, %v387
    %v412 = vmul.f32 %v316, %v388
    %v413 = vmul.f32 %v317, %v389
    %v414 = vmul.f32 %v390, 0.16666667
    %v415 = vmul.f32 %v391, 0.16666667
    %v416 = vmul.f32 %v392, 0.16666667
    %v417 = vmul.f32 %v393, 0.16666667
    %v418 = vmul.f32 %v394, 0.16666667
    %v419 = vmul.f32 %v395, 0.16666667
    %v420 = vmul.f32 %v396, 0.16666667
    %v421 = vmul.f32 %v397, 0.16666667
    %v422 = vmul.f32 %v398, 0.16666667
    %v423 = vmul.f32 %v399, 0.16666667
    %v424 = vmul.f32 %v400, 0.16666667
    %v425 = vmul.f32 %v401, 0.16666667
    %v426 = vmul.f32 %v402, 0.16666667
    %v427 = vmul.f32 %v403, 0.16666667
    %v428 = vmul.f32 %v404, 0.16666667
    %v429 = vmul.f32 %v405, 0.16666667
    %v430 = vmul.f32 %v406, 0.16666667
    %v431 = vmul.f32 %v407, 0.16666667
    %v432 = vmul.f32 %v408, 0.16666667
    %v433 = vmul.f32 %v409, 0.16666667
    %v434 = vmul.f32 %v410, 0.16666667
    %v435 = vmul.f32 %v411, 0.16666667
    %v436 = vmul.f32 %v412, 0.16666667
    %v437 = vmul.f32 %v413, 0.16666667
    %438 = vst.msk [vmem:[#allocation11] sm:$0xff] %vm70, %v414
    %439 = vst.msk [vmem:[#allocation11 + $0x8] sm:$0xff] %vm70, %v415
    %440 = vst.msk [vmem:[#allocation11 + $0x10] sm:$0xff] %vm70, %v416
    %441 = vst.msk [vmem:[#allocation11 + $0x18] sm:$0xff] %vm70, %v417
    %442 = vst.msk [vmem:[#allocation11 + $0x20] sm:$0xff] %vm70, %v418
    %443 = vst.msk [vmem:[#allocation11 + $0x28] sm:$0xff] %vm70, %v419
    %444 = vst.msk [vmem:[#allocation11 + $0x30] sm:$0xff] %vm70, %v420
    %445 = vst.msk [vmem:[#allocation11 + $0x38] sm:$0xff] %vm70, %v421
    %446 = vst.msk [vmem:[#allocation11 + $0x40] sm:$0xff] %vm70, %v422
    %447 = vst.msk [vmem:[#allocation11 + $0x48] sm:$0xff] %vm70, %v423
    %448 = vst.msk [vmem:[#allocation11 + $0x50] sm:$0xff] %vm70, %v424
    %449 = vst.msk [vmem:[#allocation11 + $0x58] sm:$0xff] %vm70, %v425
    %450 = vst.msk [vmem:[#allocation11 + $0x60] sm:$0xff] %vm70, %v426
    %451 = vst.msk [vmem:[#allocation11 + $0x68] sm:$0xff] %vm70, %v427
    %452 = vst.msk [vmem:[#allocation11 + $0x70] sm:$0xff] %vm70, %v428
    %453 = vst.msk [vmem:[#allocation11 + $0x78] sm:$0xff] %vm70, %v429
    %454 = vst.msk [vmem:[#allocation11 + $0x80] sm:$0xff] %vm70, %v430
    %455 = vst.msk [vmem:[#allocation11 + $0x88] sm:$0xff] %vm70, %v431
    %456 = vst.msk [vmem:[#allocation11 + $0x90] sm:$0xff] %vm70, %v432
    %457 = vst.msk [vmem:[#allocation11 + $0x98] sm:$0xff] %vm70, %v433
    %458 = vst.msk [vmem:[#allocation11 + $0xa0] sm:$0xff] %vm70, %v434
    %459 = vst.msk [vmem:[#allocation11 + $0xa8] sm:$0xff] %vm70, %v435
    %460 = vst.msk [vmem:[#allocation11 + $0xb0] sm:$0xff] %vm70, %v436
    %461 = vst.msk [vmem:[#allocation11 + $0xb8] sm:$0xff] %vm70, %v437
    // Predicated region
    $region26: #{model_forward.1} parent=1 // pred_check
      _
    $region27: #{model_forward.1} parent=1 // pred_check_branch
      %463 = sbr.rel (0) target = $region29
    $region28: #{model_forward.1} parent=1 // pred_region
      %s465 = ssub.s32 32, 32
      %466 = vsyncadd [#allocation4], %s465
      %s468 = sshll.u32 [#allocation7], 4
      %s469 = int_to_ptr.vmem [resolvable:$true] %s468
      %471 = dma.vmem_to_hbm [thread:$0]  %s469, 32, %s4, [#allocation4]
    $region29: #{model_forward.1} parent=1 // pred_fallthru
      _
    // Predicated region
    $region30: #{model_forward.1} parent=1 // pred_check
      _
    $region31: #{model_forward.1} parent=1 // pred_check_branch
      %473 = sbr.rel (0) target = $region33
    $region32: #{model_forward.1} parent=1 // pred_region
      %s475 = ssub.s32 128, 128
      %476 = vsyncadd [#allocation9], %s475
      %s478 = sshll.u32 [#allocation8], 4
      %s479 = int_to_ptr.vmem [resolvable:$true] %s478
      %481 = dma.vmem_to_hbm [thread:$0]  %s479, 128, %s5, [#allocation9]
    $region33: #{model_forward.1} parent=1 // pred_fallthru
      _
    // Predicated region
    $region34: #{model_forward.1} parent=1 // pred_check
      _
    $region35: #{model_forward.1} parent=1 // pred_check_branch
      %483 = sbr.rel (0) target = $region37
    $region36: #{model_forward.1} parent=1 // pred_region
      %s485 = ssub.s32 768, 768
      %486 = vsyncadd [#allocation9], %s485
      %s487 = sshll.u32 [#allocation10], 4
      %s488 = int_to_ptr.vmem [resolvable:$true] %s487
      %493 = dma.vmem_to_hbm [thread:$0]  %s488, 768, %s6, [#allocation9], 128, 128, 8
    $region37: #{model_forward.1} parent=1 // pred_fallthru
      _
    // Predicated region
    $region38: #{model_forward.1} parent=1 // pred_check
      _
    $region39: #{model_forward.1} parent=1 // pred_check_branch
      %495 = sbr.rel (0) target = $region41
    $region40: #{model_forward.1} parent=1 // pred_region
      %s497 = ssub.s32 3072, 3072
      %498 = vsyncadd [#allocation12], %s497
      %s499 = sshll.u32 [#allocation11], 4
      %s500 = int_to_ptr.vmem [resolvable:$true] %s499
      %505 = dma.vmem_to_hbm [thread:$0]  %s500, 3072, %s7, [#allocation12], 128, 128, 8
    $region41: #{model_forward.1} parent=1 // pred_fallthru
      _
    // Predicated region
    $region42: #{model_forward.1} parent=1 // pred_check
      _
    $region43: #{model_forward.1} parent=1 // pred_check_branch
      %507 = sbr.rel (0) target = $region45
    $region44: #{model_forward.1} parent=1 // pred_region
      %508 = dma.done [#allocation4], 32
    $region45: #{model_forward.1} parent=1 // pred_fallthru
      _
    // Predicated region
    $region46: #{model_forward.1} parent=1 // pred_check
      _
    $region47: #{model_forward.1} parent=1 // pred_check_branch
      %510 = sbr.rel (0) target = $region49
    $region48: #{model_forward.1} parent=1 // pred_region
      %511 = dma.done [#allocation9], 128
    $region49: #{model_forward.1} parent=1 // pred_fallthru
      _
    // Predicated region
    $region50: #{model_forward.1} parent=1 // pred_check
      _
    $region51: #{model_forward.1} parent=1 // pred_check_branch
      %513 = sbr.rel (0) target = $region53
    $region52: #{model_forward.1} parent=1 // pred_region
      %514 = dma.done [#allocation9], 768
    $region53: #{model_forward.1} parent=1 // pred_fallthru
      _
    // Predicated region
    $region54: #{model_forward.1} parent=1 // pred_check
      _
    $region55: #{model_forward.1} parent=1 // pred_check_branch
      %516 = sbr.rel (0) target = $region57
    $region56: #{model_forward.1} parent=1 // pred_region
      %517 = dma.done [#allocation12], 3072
    $region57: #{model_forward.1} parent=1 // pred_fallthru
      _
    %518 = vsyncpa [#allocation3], 1
    %519 = vsyncpa [#allocation6], 1
    %520 = vsyncpa [#allocation4], 1
    %521 = vsyncpa [#allocation9], 1
    %522 = vsyncpa [#allocation12], 1

</llo_original>
